<compile_context>
chip_gen: v6e
topology: v6e:2x2x1
jax: 0.10.0
libtpu: 0.0.40
codegen_flags: <defaults>
</compile_context>

<pallas_src>
import numpy as np

import jax
import jax.numpy as jnp
from jax.experimental import pallas as pl
from jax.experimental.pallas import tpu as pltpu

_LANES = 128
_N_HEADS = 4
_N_QUANT = 4                     # per (head, sample): sum BCE, sum p*t, sum p, sum t
_HEAD_STRIDE = 8                 # accumulator rows per head (8-aligned sublane slices)
_ACC_ROWS = _N_HEADS * _HEAD_STRIDE
_MAX_BLOCK_ROWS = 2048           # 2 inputs * 2 bufs * 2048*128*4B = 8 MiB f32 per step
# Neutral padding logit: finite in every float dtype (incl. fp16); sigmoid(-1e4) == 0
# and the logits-form BCE term is exactly 0 with the padded target of 0.
_PAD_LOGIT = -1e4


def _cdiv(a, b):
    return -(-a // b)


def _ceil_to(x, m):
    return _cdiv(x, m) * m


# ----------------------------- Pallas kernel --------------------------------
def _make_bce_dice_kernel(tile_rows, head_bounds):
    """head_bounds: per-head (start_row, end_row) Python ints within a sample's slab."""

    def kernel(d_ref, t_ref, out_ref):
        r = pl.program_id(1)

        @pl.when(r == 0)
        def _init():
            out_ref[...] = jnp.zeros_like(out_ref)

        d = d_ref[...].astype(jnp.float32)          # (SB, TR, 128)
        t = t_ref[...].astype(jnp.float32)

        # Canonical BCE-with-logits: 2 EUP transcendentals / element, no clamps.
        #   bce = max(d, 0) - d*t + log1p(exp(-|d|))
        # NOTE: torch's sigmoid -> nn.BCELoss path saturates to its 100 clamp once
        # sigmoid under/overflows (|d| > ~17); the logits form keeps |d| there.
        # Identical for typical logit magnitudes.
        e = jnp.exp(-jnp.abs(d))
        bce = jnp.maximum(d, 0.0) - d * t + jnp.log1p(e)
        p = jnp.where(d >= 0.0, 1.0, e) / (1.0 + e)     # sigmoid(d), reuses e
        pt = p * t

        # Unmasked per-lane sums over this tile's rows: used when the tile lies fully
        # inside a single head's row range (the common case for large problems).
        sums_all = jnp.concatenate(
            [jnp.sum(bce, axis=1, keepdims=True),
             jnp.sum(pt, axis=1, keepdims=True),
             jnp.sum(p, axis=1, keepdims=True),
             jnp.sum(t, axis=1, keepdims=True)], axis=1)            # (SB, 4, 128)

        tile_lo = r * tile_rows
        tile_hi = tile_lo + tile_rows
        rows = tile_lo + jax.lax.broadcasted_iota(
            jnp.int32, (1, tile_rows, _LANES), 1)

        for h, (start, end) in enumerate(head_bounds):
            inside = jnp.logical_and(tile_lo >= start, tile_hi <= end)
            overlap = jnp.logical_and(tile_lo < end, tile_hi > start)
            straddle = jnp.logical_and(overlap, jnp.logical_not(inside))
            row_lo = h * _HEAD_STRIDE

            # Fast path: whole tile belongs to head h -> one combined 4-row RMW.
            @pl.when(inside)
            def _(row_lo=row_lo):
                out_ref[:, row_lo:row_lo + _N_QUANT, :] += sums_all

            # Boundary tiles: mask rows belonging to head h, then one combined RMW.
            # (Row padding inside/after heads carries the neutral logit, so it always
            #  contributes exactly zero to every sum.)
            @pl.when(straddle)
            def _(row_lo=row_lo, start=start, end=end):
                m = jnp.logical_and(rows >= start, rows < end).astype(jnp.float32)
                upd = jnp.concatenate(
                    [jnp.sum(bce * m, axis=1, keepdims=True),
                     jnp.sum(pt * m, axis=1, keepdims=True),
                     jnp.sum(p * m, axis=1, keepdims=True),
                     jnp.sum(t * m, axis=1, keepdims=True)], axis=1)
                out_ref[:, row_lo:row_lo + _N_QUANT, :] += upd

    return kernel


# ------------------------------ JAX glue -------------------------------------
def _interp_matrix(n_in, n_out):
    """Interpolation matrix matching F.interpolate(mode='bilinear', align_corners=True)."""
    m = np.zeros((n_out, n_in), np.float32)
    if n_out == 1:
        m[0, 0] = 1.0
        return m
    src = np.arange(n_out, dtype=np.float64) * (n_in - 1) / (n_out - 1)
    lo = np.minimum(np.floor(src).astype(np.int64), n_in - 1)
    hi = np.minimum(lo + 1, n_in - 1)
    frac = (src - lo).astype(np.float32)
    rows = np.arange(n_out)
    np.add.at(m, (rows, lo), 1.0 - frac)
    np.add.at(m, (rows, hi), frac)
    return m


def _downsample_half_bilinear_align_corners(x):
    """F.interpolate(x, scale_factor=0.5, mode='bilinear', align_corners=True), gather-free."""
    _, _, H, W = x.shape
    Ho, Wo = int(H * 0.5), int(W * 0.5)
    mh = jnp.asarray(_interp_matrix(H, Ho))
    mw = jnp.asarray(_interp_matrix(W, Wo))
    y = jnp.einsum('oh,bchw->bcow', mh, x, precision=jax.lax.Precision.HIGH)
    return jnp.einsum('pw,bcow->bcop', mw, y, precision=jax.lax.Precision.HIGH)


def _pack_heads(per_head_flat, rows_per_head, r_pad, pad_val):
    """Pack per-head (B, n_h) arrays end-to-end into a (B, r_pad, 128) slab."""
    B = per_head_flat[0].shape[0]
    parts = []
    for x, rows in zip(per_head_flat, rows_per_head):
        n = x.shape[1]
        parts.append(jnp.pad(x, ((0, 0), (0, rows * _LANES - n)),
                             constant_values=pad_val))
    R = sum(rows_per_head)
    slab = jnp.concatenate(parts, axis=1).reshape(B, R, _LANES)
    if r_pad > R:
        slab = jnp.pad(slab, ((0, 0), (0, r_pad - R), (0, 0)),
                       constant_values=pad_val)
    return slab


def deep_supervision_loss(preds, gt):
    """DeepSupervisionLoss.forward with typeloss='BceDiceLoss' (sigmoid fused in-kernel)."""
    heads_d = list(preds)
    assert len(heads_d) == _N_HEADS
    B = heads_d[0].shape[0]

    # gt is halved (bilinear, align_corners=True) before each head, as in the reference.
    heads_t = []
    g = gt
    for _ in heads_d:
        g = _downsample_half_bilinear_align_corners(g)
        heads_t.append(g)

    # Ragged packing: each head is padded only to a whole 128-lane row, then the four
    # heads of a sample are concatenated end-to-end along the row axis.
    n_elems = [int(np.prod(d.shape[1:])) for d in heads_d]
    rows_per_head = [_cdiv(n, _LANES) for n in n_elems]
    head_bounds, off = [], 0
    for rows in rows_per_head:
        head_bounds.append((off, off + rows))
        off += rows
    R = off

    # Tile selection: collapse to a single (or few) grid step(s) when everything fits,
    # otherwise per-sample row tiling with the largest tile that stays VMEM-safe.
    r8 = _ceil_to(R, 8)
    if r8 <= _MAX_BLOCK_ROWS:
        sample_block = max(sb for sb in range(1, B + 1)
                           if B % sb == 0 and sb * r8 <= _MAX_BLOCK_ROWS)
        tile_rows, n_row_tiles = r8, 1
    else:
        sample_block = 1
        n_row_tiles = _cdiv(R, _MAX_BLOCK_ROWS)
        tile_rows = _ceil_to(_cdiv(R, n_row_tiles), 8)
    r_pad = tile_rows * n_row_tiles
    grid = (B // sample_block, n_row_tiles)

    d_flat = [d.reshape(B, n) for d, n in zip(heads_d, n_elems)]
    t_flat = [t.reshape(B, n) for t, n in zip(heads_t, n_elems)]
    d_slab = _pack_heads(d_flat, rows_per_head, r_pad, _PAD_LOGIT)   # native dtype
    t_slab = _pack_heads(t_flat, rows_per_head, r_pad, 0.0)
    # NOTE: streaming d_slab/t_slab as bfloat16 would halve HBM bytes (accumulation is
    # f32 in-kernel); kept native dtype here for exact parity with the f32 reference.

    kernel = _make_bce_dice_kernel(tile_rows, tuple(head_bounds))
    partials = pl.pallas_call(
        kernel,
        out_shape=jax.ShapeDtypeStruct((B, _ACC_ROWS, _LANES), jnp.float32),
        grid_spec=pltpu.PrefetchScalarGridSpec(
            num_scalar_prefetch=0,
            grid=grid,
            in_specs=[
                pl.BlockSpec((sample_block, tile_rows, _LANES), lambda s, r: (s, r, 0)),
                pl.BlockSpec((sample_block, tile_rows, _LANES), lambda s, r: (s, r, 0)),
            ],
            out_specs=pl.BlockSpec((sample_block, _ACC_ROWS, _LANES),
                                   lambda s, r: (s, 0, 0)),
        ),
        compiler_params=pltpu.CompilerParams(
            dimension_semantics=("parallel", "arbitrary"),
            vmem_limit_bytes=32 * 1024 * 1024,
        ),
    )(d_slab, t_slab)

    # Tiny final reductions over (B, heads, 4) scalars.
    sums = jnp.sum(partials, axis=-1).reshape(B, _N_HEADS, _HEAD_STRIDE)[..., :_N_QUANT]
    bce_sum = sums[..., 0]                                   # (B, heads)
    inter, psum, tsum = sums[..., 1], sums[..., 2], sums[..., 3]
    n_e = jnp.asarray(n_elems, jnp.float32)
    bce_mean = jnp.sum(bce_sum, axis=0) / (n_e * B)          # nn.BCELoss mean per head
    dice_score = (2.0 * inter + 1.0) / (psum + tsum + 1.0)   # smooth = 1
    dice_loss = 1.0 - jnp.sum(dice_score, axis=0) / B
    return jnp.sum(bce_mean + dice_loss)


# -------------------------------- main ----------------------------------------
if __name__ == "__main__":
    key = jax.random.PRNGKey(0)
    k1, k2, k3, k4, kg = jax.random.split(key, 5)

    B, C = 2, 1
    # gt at 32x32; deep-supervision heads at 16, 8, 4, 2 (each matches the halved gt).
    gt = (jax.random.uniform(kg, (B, C, 32, 32)) > 0.5).astype(jnp.float32)
    d1 = jax.random.normal(k1, (B, C, 16, 16), jnp.float32)
    d2 = jax.random.normal(k2, (B, C, 8, 8), jnp.float32)
    d3 = jax.random.normal(k3, (B, C, 4, 4), jnp.float32)
    d4 = jax.random.normal(k4, (B, C, 2, 2), jnp.float32)

    loss = jax.jit(deep_supervision_loss)((d1, d2, d3, d4), gt)
    jax.block_until_ready(loss)
    print("KERNEL_OK")
</pallas_src>

<mosaic_0001>
module attributes {stable_mosaic.version = 11 : i64} {
  func.func @kernel(%arg0: i32, %arg1: i32, %arg2: memref<2x8x128xf32, #tpu.memory_space<vmem>>, %arg3: memref<2x8x128xf32, #tpu.memory_space<vmem>>, %arg4: memref<2x32x128xf32, #tpu.memory_space<vmem>>) attributes {dimension_semantics = [#tpu.dimension_semantics<parallel>, #tpu.dimension_semantics<arbitrary>], iteration_bounds = array<i64: 1, 1>, scalar_prefetch = 0 : i64, scratch_operands = 0 : i64, tpu.core_type = #tpu.core_type<tc>, window_params = [{transform_indices = @transform_0, window_bounds = array<i64: 2, 8, 128>}, {transform_indices = @transform_1, window_bounds = array<i64: 2, 8, 128>}, {transform_indices = @transform_2, window_bounds = array<i64: 2, 32, 128>}]} {
    %c0_i32 = arith.constant 0 : i32
    %0 = arith.cmpi eq, %arg1, %c0_i32 : i32
    %1 = arith.extui %0 : i1 to i32
    %c0_i32_0 = arith.constant 0 : i32
    %2 = arith.cmpi ne, %1, %c0_i32_0 : i32
    scf.if %2 {
      %cst_38 = arith.constant 0.000000e+00 : f32
      %85 = vector.broadcast %cst_38 : f32 to vector<2x32x128xf32>
      %c0_39 = arith.constant 0 : index
      %c0_40 = arith.constant 0 : index
      %c0_41 = arith.constant 0 : index
      %86 = vector.load %arg4[%c0_39, %c0_40, %c0_41] : memref<2x32x128xf32, #tpu.memory_space<vmem>>, vector<2x32x128xf32>
      tpu.vector_store %arg4[%c0_39, %c0_40, %c0_41], %85 {strides = array<i32>} : memref<2x32x128xf32, #tpu.memory_space<vmem>>, vector<2x32x128xf32>,
    } else {
    }
    %c0 = arith.constant 0 : index
    %c0_1 = arith.constant 0 : index
    %c0_2 = arith.constant 0 : index
    %3 = vector.load %arg2[%c0, %c0_1, %c0_2] : memref<2x8x128xf32, #tpu.memory_space<vmem>>, vector<2x8x128xf32>
    %c0_3 = arith.constant 0 : index
    %c0_4 = arith.constant 0 : index
    %c0_5 = arith.constant 0 : index
    %4 = vector.load %arg3[%c0_3, %c0_4, %c0_5] : memref<2x8x128xf32, #tpu.memory_space<vmem>>, vector<2x8x128xf32>
    %5 = math.absf %3 : vector<2x8x128xf32>
    %cst = arith.constant 0.000000e+00 : f32
    %6 = vector.broadcast %cst : f32 to vector<2x8x128xf32>
    %7 = arith.subf %6, %5 : vector<2x8x128xf32>
    %8 = math.exp %7 : vector<2x8x128xf32>
    %cst_6 = arith.constant 0.000000e+00 : f32
    %9 = vector.broadcast %cst_6 : f32 to vector<2x8x128xf32>
    %10 = arith.maximumf %3, %9 : vector<2x8x128xf32>
    %11 = arith.mulf %3, %4 : vector<2x8x128xf32>
    %12 = arith.subf %10, %11 : vector<2x8x128xf32>
    %13 = math.log1p %8 : vector<2x8x128xf32>
    %14 = arith.addf %12, %13 : vector<2x8x128xf32>
    %cst_7 = arith.constant 0.000000e+00 : f32
    %15 = vector.broadcast %cst_7 : f32 to vector<2x8x128xf32>
    %16 = arith.cmpf oge, %3, %15 : vector<2x8x128xf32>
    %cst_8 = arith.constant 1.000000e+00 : f32
    %17 = vector.broadcast %cst_8 : f32 to vector<2x8x128xf32>
    %18 = arith.select %16, %17, %8 : vector<2x8x128xi1>, vector<2x8x128xf32>
    %cst_9 = arith.constant 1.000000e+00 : f32
    %19 = vector.broadcast %cst_9 : f32 to vector<2x8x128xf32>
    %20 = arith.addf %19, %8 : vector<2x8x128xf32>
    %21 = arith.divf %18, %20 : vector<2x8x128xf32>
    %22 = arith.mulf %21, %4 : vector<2x8x128xf32>
    %cst_10 = arith.constant dense<0.000000e+00> : vector<2x128xf32>
    %23 = vector.multi_reduction <add>, %14, %cst_10 [1] : vector<2x8x128xf32> to vector<2x128xf32>
    %24 = vector.shape_cast %23 : vector<2x128xf32> to vector<2x1x128xf32>
    %cst_11 = arith.constant dense<0.000000e+00> : vector<2x128xf32>
    %25 = vector.multi_reduction <add>, %22, %cst_11 [1] : vector<2x8x128xf32> to vector<2x128xf32>
    %26 = vector.shape_cast %25 : vector<2x128xf32> to vector<2x1x128xf32>
    %cst_12 = arith.constant dense<0.000000e+00> : vector<2x128xf32>
    %27 = vector.multi_reduction <add>, %21, %cst_12 [1] : vector<2x8x128xf32> to vector<2x128xf32>
    %28 = vector.shape_cast %27 : vector<2x128xf32> to vector<2x1x128xf32>
    %cst_13 = arith.constant dense<0.000000e+00> : vector<2x128xf32>
    %29 = vector.multi_reduction <add>, %4, %cst_13 [1] : vector<2x8x128xf32> to vector<2x128xf32>
    %30 = vector.shape_cast %29 : vector<2x128xf32> to vector<2x1x128xf32>
    %31 = tpu.concatenate %24, %26, %28, %30 in 1 : vector<2x1x128xf32>, vector<2x1x128xf32>, vector<2x1x128xf32>, vector<2x1x128xf32> -> vector<2x4x128xf32>
    %c8_i32 = arith.constant 8 : i32
    %32 = arith.muli %arg1, %c8_i32 : i32
    %c8_i32_14 = arith.constant 8 : i32
    %33 = arith.addi %32, %c8_i32_14 : i32
    %34 = tpu.iota {dimensions = array<i32: 1>} : vector<1x8x128xi32>
    %35 = vector.broadcast %32 : i32 to vector<1x8x128xi32>
    %36 = arith.addi %35, %34 : vector<1x8x128xi32>
    %c0_i32_15 = arith.constant 0 : i32
    %37 = arith.cmpi sge, %32, %c0_i32_15 : i32
    %c2_i32 = arith.constant 2 : i32
    %38 = arith.cmpi sle, %33, %c2_i32 : i32
    %39 = arith.andi %37, %38 : i1
    %c2_i32_16 = arith.constant 2 : i32
    %40 = arith.cmpi slt, %32, %c2_i32_16 : i32
    %c0_i32_17 = arith.constant 0 : i32
    %41 = arith.cmpi sgt, %33, %c0_i32_17 : i32
    %42 = arith.andi %40, %41 : i1
    %true = arith.constant true
    %43 = arith.xori %39, %true : i1
    %44 = arith.andi %42, %43 : i1
    %45 = arith.extui %39 : i1 to i32
    %c0_i32_18 = arith.constant 0 : i32
    %46 = arith.cmpi ne, %45, %c0_i32_18 : i32
    scf.if %46 {
      %c0_38 = arith.constant 0 : index
      %c0_39 = arith.constant 0 : index
      %c0_40 = arith.constant 0 : index
      %85 = vector.load %arg4[%c0_38, %c0_39, %c0_40] : memref<2x32x128xf32, #tpu.memory_space<vmem>>, vector<2x4x128xf32>
      %86 = arith.addf %85, %31 : vector<2x4x128xf32>
      %c0_41 = arith.constant 0 : index
      %c0_42 = arith.constant 0 : index
      %c0_43 = arith.constant 0 : index
      %87 = vector.load %arg4[%c0_41, %c0_42, %c0_43] : memref<2x32x128xf32, #tpu.memory_space<vmem>>, vector<2x4x128xf32>
      tpu.vector_store %arg4[%c0_41, %c0_42, %c0_43], %86 {strides = array<i32>} : memref<2x32x128xf32, #tpu.memory_space<vmem>>, vector<2x4x128xf32>,
    } else {
    }
    %47 = arith.extui %44 : i1 to i32
    %c0_i32_19 = arith.constant 0 : i32
    %48 = arith.cmpi ne, %47, %c0_i32_19 : i32
    scf.if %48 {
      %c0_i32_38 = arith.constant 0 : i32
      %85 = vector.broadcast %c0_i32_38 : i32 to vector<1x8x128xi32>
      %86 = arith.cmpi sge, %36, %85 : vector<1x8x128xi32>
      %c2_i32_39 = arith.constant 2 : i32
      %87 = vector.broadcast %c2_i32_39 : i32 to vector<1x8x128xi32>
      %88 = arith.cmpi slt, %36, %87 : vector<1x8x128xi32>
      %89 = arith.andi %86, %88 : vector<1x8x128xi1>
      %90 = arith.extui %89 : vector<1x8x128xi1> to vector<1x8x128xi32>
      %91 = arith.sitofp %90 : vector<1x8x128xi32> to vector<1x8x128xf32>
      %92 = vector.broadcast %91 : vector<1x8x128xf32> to vector<2x8x128xf32>
      %93 = arith.mulf %14, %92 : vector<2x8x128xf32>
      %cst_40 = arith.constant dense<0.000000e+00> : vector<2x128xf32>
      %94 = vector.multi_reduction <add>, %93, %cst_40 [1] : vector<2x8x128xf32> to vector<2x128xf32>
      %95 = vector.shape_cast %94 : vector<2x128xf32> to vector<2x1x128xf32>
      %96 = vector.broadcast %91 : vector<1x8x128xf32> to vector<2x8x128xf32>
      %97 = arith.mulf %22, %96 : vector<2x8x128xf32>
      %cst_41 = arith.constant dense<0.000000e+00> : vector<2x128xf32>
      %98 = vector.multi_reduction <add>, %97, %cst_41 [1] : vector<2x8x128xf32> to vector<2x128xf32>
      %99 = vector.shape_cast %98 : vector<2x128xf32> to vector<2x1x128xf32>
      %100 = vector.broadcast %91 : vector<1x8x128xf32> to vector<2x8x128xf32>
      %101 = arith.mulf %21, %100 : vector<2x8x128xf32>
      %cst_42 = arith.constant dense<0.000000e+00> : vector<2x128xf32>
      %102 = vector.multi_reduction <add>, %101, %cst_42 [1] : vector<2x8x128xf32> to vector<2x128xf32>
      %103 = vector.shape_cast %102 : vector<2x128xf32> to vector<2x1x128xf32>
      %104 = vector.broadcast %91 : vector<1x8x128xf32> to vector<2x8x128xf32>
      %105 = arith.mulf %4, %104 : vector<2x8x128xf32>
      %cst_43 = arith.constant dense<0.000000e+00> : vector<2x128xf32>
      %106 = vector.multi_reduction <add>, %105, %cst_43 [1] : vector<2x8x128xf32> to vector<2x128xf32>
      %107 = vector.shape_cast %106 : vector<2x128xf32> to vector<2x1x128xf32>
      %108 = tpu.concatenate %95, %99, %103, %107 in 1 : vector<2x1x128xf32>, vector<2x1x128xf32>, vector<2x1x128xf32>, vector<2x1x128xf32> -> vector<2x4x128xf32>
      %c0_44 = arith.constant 0 : index
      %c0_45 = arith.constant 0 : index
      %c0_46 = arith.constant 0 : index
      %109 = vector.load %arg4[%c0_44, %c0_45, %c0_46] : memref<2x32x128xf32, #tpu.memory_space<vmem>>, vector<2x4x128xf32>
      %110 = arith.addf %109, %108 : vector<2x4x128xf32>
      %c0_47 = arith.constant 0 : index
      %c0_48 = arith.constant 0 : index
      %c0_49 = arith.constant 0 : index
      %111 = vector.load %arg4[%c0_47, %c0_48, %c0_49] : memref<2x32x128xf32, #tpu.memory_space<vmem>>, vector<2x4x128xf32>
      tpu.vector_store %arg4[%c0_47, %c0_48, %c0_49], %110 {strides = array<i32>} : memref<2x32x128xf32, #tpu.memory_space<vmem>>, vector<2x4x128xf32>,
    } else {
    }
    %c2_i32_20 = arith.constant 2 : i32
    %49 = arith.cmpi sge, %32, %c2_i32_20 : i32
    %c3_i32 = arith.constant 3 : i32
    %50 = arith.cmpi sle, %33, %c3_i32 : i32
    %51 = arith.andi %49, %50 : i1
    %c3_i32_21 = arith.constant 3 : i32
    %52 = arith.cmpi slt, %32, %c3_i32_21 : i32
    %c2_i32_22 = arith.constant 2 : i32
    %53 = arith.cmpi sgt, %33, %c2_i32_22 : i32
    %54 = arith.andi %52, %53 : i1
    %true_23 = arith.constant true
    %55 = arith.xori %51, %true_23 : i1
    %56 = arith.andi %54, %55 : i1
    %57 = arith.extui %51 : i1 to i32
    %c0_i32_24 = arith.constant 0 : i32
    %58 = arith.cmpi ne, %57, %c0_i32_24 : i32
    scf.if %58 {
      %c0_38 = arith.constant 0 : index
      %c8 = arith.constant 8 : index
      %c0_39 = arith.constant 0 : index
      %85 = vector.load %arg4[%c0_38, %c8, %c0_39] : memref<2x32x128xf32, #tpu.memory_space<vmem>>, vector<2x4x128xf32>
      %86 = arith.addf %85, %31 : vector<2x4x128xf32>
      %c0_40 = arith.constant 0 : index
      %c8_41 = arith.constant 8 : index
      %c0_42 = arith.constant 0 : index
      %87 = vector.load %arg4[%c0_40, %c8_41, %c0_42] : memref<2x32x128xf32, #tpu.memory_space<vmem>>, vector<2x4x128xf32>
      tpu.vector_store %arg4[%c0_40, %c8_41, %c0_42], %86 {strides = array<i32>} : memref<2x32x128xf32, #tpu.memory_space<vmem>>, vector<2x4x128xf32>,
    } else {
    }
    %59 = arith.extui %56 : i1 to i32
    %c0_i32_25 = arith.constant 0 : i32
    %60 = arith.cmpi ne, %59, %c0_i32_25 : i32
    scf.if %60 {
      %c2_i32_38 = arith.constant 2 : i32
      %85 = vector.broadcast %c2_i32_38 : i32 to vector<1x8x128xi32>
      %86 = arith.cmpi sge, %36, %85 : vector<1x8x128xi32>
      %c3_i32_39 = arith.constant 3 : i32
      %87 = vector.broadcast %c3_i32_39 : i32 to vector<1x8x128xi32>
      %88 = arith.cmpi slt, %36, %87 : vector<1x8x128xi32>
      %89 = arith.andi %86, %88 : vector<1x8x128xi1>
      %90 = arith.extui %89 : vector<1x8x128xi1> to vector<1x8x128xi32>
      %91 = arith.sitofp %90 : vector<1x8x128xi32> to vector<1x8x128xf32>
      %92 = vector.broadcast %91 : vector<1x8x128xf32> to vector<2x8x128xf32>
      %93 = arith.mulf %14, %92 : vector<2x8x128xf32>
      %cst_40 = arith.constant dense<0.000000e+00> : vector<2x128xf32>
      %94 = vector.multi_reduction <add>, %93, %cst_40 [1] : vector<2x8x128xf32> to vector<2x128xf32>
      %95 = vector.shape_cast %94 : vector<2x128xf32> to vector<2x1x128xf32>
      %96 = vector.broadcast %91 : vector<1x8x128xf32> to vector<2x8x128xf32>
      %97 = arith.mulf %22, %96 : vector<2x8x128xf32>
      %cst_41 = arith.constant dense<0.000000e+00> : vector<2x128xf32>
      %98 = vector.multi_reduction <add>, %97, %cst_41 [1] : vector<2x8x128xf32> to vector<2x128xf32>
      %99 = vector.shape_cast %98 : vector<2x128xf32> to vector<2x1x128xf32>
      %100 = vector.broadcast %91 : vector<1x8x128xf32> to vector<2x8x128xf32>
      %101 = arith.mulf %21, %100 : vector<2x8x128xf32>
      %cst_42 = arith.constant dense<0.000000e+00> : vector<2x128xf32>
      %102 = vector.multi_reduction <add>, %101, %cst_42 [1] : vector<2x8x128xf32> to vector<2x128xf32>
      %103 = vector.shape_cast %102 : vector<2x128xf32> to vector<2x1x128xf32>
      %104 = vector.broadcast %91 : vector<1x8x128xf32> to vector<2x8x128xf32>
      %105 = arith.mulf %4, %104 : vector<2x8x128xf32>
      %cst_43 = arith.constant dense<0.000000e+00> : vector<2x128xf32>
      %106 = vector.multi_reduction <add>, %105, %cst_43 [1] : vector<2x8x128xf32> to vector<2x128xf32>
      %107 = vector.shape_cast %106 : vector<2x128xf32> to vector<2x1x128xf32>
      %108 = tpu.concatenate %95, %99, %103, %107 in 1 : vector<2x1x128xf32>, vector<2x1x128xf32>, vector<2x1x128xf32>, vector<2x1x128xf32> -> vector<2x4x128xf32>
      %c0_44 = arith.constant 0 : index
      %c8 = arith.constant 8 : index
      %c0_45 = arith.constant 0 : index
      %109 = vector.load %arg4[%c0_44, %c8, %c0_45] : memref<2x32x128xf32, #tpu.memory_space<vmem>>, vector<2x4x128xf32>
      %110 = arith.addf %109, %108 : vector<2x4x128xf32>
      %c0_46 = arith.constant 0 : index
      %c8_47 = arith.constant 8 : index
      %c0_48 = arith.constant 0 : index
      %111 = vector.load %arg4[%c0_46, %c8_47, %c0_48] : memref<2x32x128xf32, #tpu.memory_space<vmem>>, vector<2x4x128xf32>
      tpu.vector_store %arg4[%c0_46, %c8_47, %c0_48], %110 {strides = array<i32>} : memref<2x32x128xf32, #tpu.memory_space<vmem>>, vector<2x4x128xf32>,
    } else {
    }
    %c3_i32_26 = arith.constant 3 : i32
    %61 = arith.cmpi sge, %32, %c3_i32_26 : i32
    %c4_i32 = arith.constant 4 : i32
    %62 = arith.cmpi sle, %33, %c4_i32 : i32
    %63 = arith.andi %61, %62 : i1
    %c4_i32_27 = arith.constant 4 : i32
    %64 = arith.cmpi slt, %32, %c4_i32_27 : i32
    %c3_i32_28 = arith.constant 3 : i32
    %65 = arith.cmpi sgt, %33, %c3_i32_28 : i32
    %66 = arith.andi %64, %65 : i1
    %true_29 = arith.constant true
    %67 = arith.xori %63, %true_29 : i1
    %68 = arith.andi %66, %67 : i1
    %69 = arith.extui %63 : i1 to i32
    %c0_i32_30 = arith.constant 0 : i32
    %70 = arith.cmpi ne, %69, %c0_i32_30 : i32
    scf.if %70 {
      %c0_38 = arith.constant 0 : index
      %c16 = arith.constant 16 : index
      %c0_39 = arith.constant 0 : index
      %85 = vector.load %arg4[%c0_38, %c16, %c0_39] : memref<2x32x128xf32, #tpu.memory_space<vmem>>, vector<2x4x128xf32>
      %86 = arith.addf %85, %31 : vector<2x4x128xf32>
      %c0_40 = arith.constant 0 : index
      %c16_41 = arith.constant 16 : index
      %c0_42 = arith.constant 0 : index
      %87 = vector.load %arg4[%c0_40, %c16_41, %c0_42] : memref<2x32x128xf32, #tpu.memory_space<vmem>>, vector<2x4x128xf32>
      tpu.vector_store %arg4[%c0_40, %c16_41, %c0_42], %86 {strides = array<i32>} : memref<2x32x128xf32, #tpu.memory_space<vmem>>, vector<2x4x128xf32>,
    } else {
    }
    %71 = arith.extui %68 : i1 to i32
    %c0_i32_31 = arith.constant 0 : i32
    %72 = arith.cmpi ne, %71, %c0_i32_31 : i32
    scf.if %72 {
      %c3_i32_38 = arith.constant 3 : i32
      %85 = vector.broadcast %c3_i32_38 : i32 to vector<1x8x128xi32>
      %86 = arith.cmpi sge, %36, %85 : vector<1x8x128xi32>
      %c4_i32_39 = arith.constant 4 : i32
      %87 = vector.broadcast %c4_i32_39 : i32 to vector<1x8x128xi32>
      %88 = arith.cmpi slt, %36, %87 : vector<1x8x128xi32>
      %89 = arith.andi %86, %88 : vector<1x8x128xi1>
      %90 = arith.extui %89 : vector<1x8x128xi1> to vector<1x8x128xi32>
      %91 = arith.sitofp %90 : vector<1x8x128xi32> to vector<1x8x128xf32>
      %92 = vector.broadcast %91 : vector<1x8x128xf32> to vector<2x8x128xf32>
      %93 = arith.mulf %14, %92 : vector<2x8x128xf32>
      %cst_40 = arith.constant dense<0.000000e+00> : vector<2x128xf32>
      %94 = vector.multi_reduction <add>, %93, %cst_40 [1] : vector<2x8x128xf32> to vector<2x128xf32>
      %95 = vector.shape_cast %94 : vector<2x128xf32> to vector<2x1x128xf32>
      %96 = vector.broadcast %91 : vector<1x8x128xf32> to vector<2x8x128xf32>
      %97 = arith.mulf %22, %96 : vector<2x8x128xf32>
      %cst_41 = arith.constant dense<0.000000e+00> : vector<2x128xf32>
      %98 = vector.multi_reduction <add>, %97, %cst_41 [1] : vector<2x8x128xf32> to vector<2x128xf32>
      %99 = vector.shape_cast %98 : vector<2x128xf32> to vector<2x1x128xf32>
      %100 = vector.broadcast %91 : vector<1x8x128xf32> to vector<2x8x128xf32>
      %101 = arith.mulf %21, %100 : vector<2x8x128xf32>
      %cst_42 = arith.constant dense<0.000000e+00> : vector<2x128xf32>
      %102 = vector.multi_reduction <add>, %101, %cst_42 [1] : vector<2x8x128xf32> to vector<2x128xf32>
      %103 = vector.shape_cast %102 : vector<2x128xf32> to vector<2x1x128xf32>
      %104 = vector.broadcast %91 : vector<1x8x128xf32> to vector<2x8x128xf32>
      %105 = arith.mulf %4, %104 : vector<2x8x128xf32>
      %cst_43 = arith.constant dense<0.000000e+00> : vector<2x128xf32>
      %106 = vector.multi_reduction <add>, %105, %cst_43 [1] : vector<2x8x128xf32> to vector<2x128xf32>
      %107 = vector.shape_cast %106 : vector<2x128xf32> to vector<2x1x128xf32>
      %108 = tpu.concatenate %95, %99, %103, %107 in 1 : vector<2x1x128xf32>, vector<2x1x128xf32>, vector<2x1x128xf32>, vector<2x1x128xf32> -> vector<2x4x128xf32>
      %c0_44 = arith.constant 0 : index
      %c16 = arith.constant 16 : index
      %c0_45 = arith.constant 0 : index
      %109 = vector.load %arg4[%c0_44, %c16, %c0_45] : memref<2x32x128xf32, #tpu.memory_space<vmem>>, vector<2x4x128xf32>
      %110 = arith.addf %109, %108 : vector<2x4x128xf32>
      %c0_46 = arith.constant 0 : index
      %c16_47 = arith.constant 16 : index
      %c0_48 = arith.constant 0 : index
      %111 = vector.load %arg4[%c0_46, %c16_47, %c0_48] : memref<2x32x128xf32, #tpu.memory_space<vmem>>, vector<2x4x128xf32>
      tpu.vector_store %arg4[%c0_46, %c16_47, %c0_48], %110 {strides = array<i32>} : memref<2x32x128xf32, #tpu.memory_space<vmem>>, vector<2x4x128xf32>,
    } else {
    }
    %c4_i32_32 = arith.constant 4 : i32
    %73 = arith.cmpi sge, %32, %c4_i32_32 : i32
    %c5_i32 = arith.constant 5 : i32
    %74 = arith.cmpi sle, %33, %c5_i32 : i32
    %75 = arith.andi %73, %74 : i1
    %c5_i32_33 = arith.constant 5 : i32
    %76 = arith.cmpi slt, %32, %c5_i32_33 : i32
    %c4_i32_34 = arith.constant 4 : i32
    %77 = arith.cmpi sgt, %33, %c4_i32_34 : i32
    %78 = arith.andi %76, %77 : i1
    %true_35 = arith.constant true
    %79 = arith.xori %75, %true_35 : i1
    %80 = arith.andi %78, %79 : i1
    %81 = arith.extui %75 : i1 to i32
    %c0_i32_36 = arith.constant 0 : i32
    %82 = arith.cmpi ne, %81, %c0_i32_36 : i32
    scf.if %82 {
      %c0_38 = arith.constant 0 : index
      %c24 = arith.constant 24 : index
      %c0_39 = arith.constant 0 : index
      %85 = vector.load %arg4[%c0_38, %c24, %c0_39] : memref<2x32x128xf32, #tpu.memory_space<vmem>>, vector<2x4x128xf32>
      %86 = arith.addf %85, %31 : vector<2x4x128xf32>
      %c0_40 = arith.constant 0 : index
      %c24_41 = arith.constant 24 : index
      %c0_42 = arith.constant 0 : index
      %87 = vector.load %arg4[%c0_40, %c24_41, %c0_42] : memref<2x32x128xf32, #tpu.memory_space<vmem>>, vector<2x4x128xf32>
      tpu.vector_store %arg4[%c0_40, %c24_41, %c0_42], %86 {strides = array<i32>} : memref<2x32x128xf32, #tpu.memory_space<vmem>>, vector<2x4x128xf32>,
    } else {
    }
    %83 = arith.extui %80 : i1 to i32
    %c0_i32_37 = arith.constant 0 : i32
    %84 = arith.cmpi ne, %83, %c0_i32_37 : i32
    scf.if %84 {
      %c4_i32_38 = arith.constant 4 : i32
      %85 = vector.broadcast %c4_i32_38 : i32 to vector<1x8x128xi32>
      %86 = arith.cmpi sge, %36, %85 : vector<1x8x128xi32>
      %c5_i32_39 = arith.constant 5 : i32
      %87 = vector.broadcast %c5_i32_39 : i32 to vector<1x8x128xi32>
      %88 = arith.cmpi slt, %36, %87 : vector<1x8x128xi32>
      %89 = arith.andi %86, %88 : vector<1x8x128xi1>
      %90 = arith.extui %89 : vector<1x8x128xi1> to vector<1x8x128xi32>
      %91 = arith.sitofp %90 : vector<1x8x128xi32> to vector<1x8x128xf32>
      %92 = vector.broadcast %91 : vector<1x8x128xf32> to vector<2x8x128xf32>
      %93 = arith.mulf %14, %92 : vector<2x8x128xf32>
      %cst_40 = arith.constant dense<0.000000e+00> : vector<2x128xf32>
      %94 = vector.multi_reduction <add>, %93, %cst_40 [1] : vector<2x8x128xf32> to vector<2x128xf32>
      %95 = vector.shape_cast %94 : vector<2x128xf32> to vector<2x1x128xf32>
      %96 = vector.broadcast %91 : vector<1x8x128xf32> to vector<2x8x128xf32>
      %97 = arith.mulf %22, %96 : vector<2x8x128xf32>
      %cst_41 = arith.constant dense<0.000000e+00> : vector<2x128xf32>
      %98 = vector.multi_reduction <add>, %97, %cst_41 [1] : vector<2x8x128xf32> to vector<2x128xf32>
      %99 = vector.shape_cast %98 : vector<2x128xf32> to vector<2x1x128xf32>
      %100 = vector.broadcast %91 : vector<1x8x128xf32> to vector<2x8x128xf32>
      %101 = arith.mulf %21, %100 : vector<2x8x128xf32>
      %cst_42 = arith.constant dense<0.000000e+00> : vector<2x128xf32>
      %102 = vector.multi_reduction <add>, %101, %cst_42 [1] : vector<2x8x128xf32> to vector<2x128xf32>
      %103 = vector.shape_cast %102 : vector<2x128xf32> to vector<2x1x128xf32>
      %104 = vector.broadcast %91 : vector<1x8x128xf32> to vector<2x8x128xf32>
      %105 = arith.mulf %4, %104 : vector<2x8x128xf32>
      %cst_43 = arith.constant dense<0.000000e+00> : vector<2x128xf32>
      %106 = vector.multi_reduction <add>, %105, %cst_43 [1] : vector<2x8x128xf32> to vector<2x128xf32>
      %107 = vector.shape_cast %106 : vector<2x128xf32> to vector<2x1x128xf32>
      %108 = tpu.concatenate %95, %99, %103, %107 in 1 : vector<2x1x128xf32>, vector<2x1x128xf32>, vector<2x1x128xf32>, vector<2x1x128xf32> -> vector<2x4x128xf32>
      %c0_44 = arith.constant 0 : index
      %c24 = arith.constant 24 : index
      %c0_45 = arith.constant 0 : index
      %109 = vector.load %arg4[%c0_44, %c24, %c0_45] : memref<2x32x128xf32, #tpu.memory_space<vmem>>, vector<2x4x128xf32>
      %110 = arith.addf %109, %108 : vector<2x4x128xf32>
      %c0_46 = arith.constant 0 : index
      %c24_47 = arith.constant 24 : index
      %c0_48 = arith.constant 0 : index
      %111 = vector.load %arg4[%c0_46, %c24_47, %c0_48] : memref<2x32x128xf32, #tpu.memory_space<vmem>>, vector<2x4x128xf32>
      tpu.vector_store %arg4[%c0_46, %c24_47, %c0_48], %110 {strides = array<i32>} : memref<2x32x128xf32, #tpu.memory_space<vmem>>, vector<2x4x128xf32>,
    } else {
    }
    return
  }
  func.func @transform_0(%arg0: i32, %arg1: i32) -> (i32, i32, i32) {
    %c0_i32 = arith.constant 0 : i32
    %c0_i32_0 = arith.constant 0 : i32
    return %arg0, %arg1, %c0_i32 : i32, i32, i32
  }
  func.func @transform_1(%arg0: i32, %arg1: i32) -> (i32, i32, i32) {
    %c0_i32 = arith.constant 0 : i32
    %c0_i32_0 = arith.constant 0 : i32
    return %arg0, %arg1, %c0_i32 : i32, i32, i32
  }
  func.func @transform_2(%arg0: i32, %arg1: i32) -> (i32, i32, i32) {
    %c0_i32 = arith.constant 0 : i32
    %c0_i32_0 = arith.constant 0 : i32
    %c0_i32_1 = arith.constant 0 : i32
    return %arg0, %c0_i32, %c0_i32_0 : i32, i32, i32
  }
}

</mosaic_0001>

<llo_original>
// kernel: deep_supervision_loss.1
$region0: #{deep_supervision_loss.1}
  #allocation0 [shape = 'u32[]', space=smem, size = 0x4, offset = 0x4, fixed_abs, tag = 'smem constant byte address 0x4 - core index']
  #allocation1 [shape = 'u32[144,128]{1,0:T(1,128)}', space=vmem, size = 0x12000, scoped, tag = 'internal scratch']
  %s0 = inlined_call_operand.vmem [shape: f32[2,8,128], index: 0, kind: input, shape index: {}]
  %s1 = inlined_call_operand.vmem [shape: f32[2,8,128], index: 1, kind: input, shape index: {}]
  %s2 = inlined_call_operand.vmem [shape: f32[2,32,128], index: 2, kind: output, shape index: {}]
  %s3 = sld [smem:[#allocation0]]
  $region54: #{deep_supervision_loss.1} parent=0
    _
  %s5 = ssub.s32 1, %s3
  %s6 = scalar_select 0, %s5, %s3
  // Predicated region
  $region2: #{deep_supervision_loss.1} parent=0 // pred_check
    _
  $region3: #{deep_supervision_loss.1} parent=0 // pred_check_branch
    %8 = sbr.rel (0) target = $region5
  $region4: #{deep_supervision_loss.1} parent=0 // pred_region
    _
  $region5: #{deep_supervision_loss.1} parent=0 // pred_fallthru
    _
  // Predicated region
  $region6: #{deep_supervision_loss.1} parent=0 // pred_check
    _
  $region7: #{deep_supervision_loss.1} parent=0 // pred_check_branch
    %10 = sbr.rel (0) target = $region9
  $region8: #{deep_supervision_loss.1} parent=0 // pred_region
    _
  $region9: #{deep_supervision_loss.1} parent=0 // pred_fallthru
    _
  %p11 = scmp.eq.s32.totalorder 0, 0
  // Predicated region
  $region10: #{deep_supervision_loss.1} parent=0 // pred_check
    %p12 = pneg %p11
  $region11: #{deep_supervision_loss.1} parent=0 // pred_check_branch
    %14 = sbr.rel (%p12) target = $region13
  $region12: #{deep_supervision_loss.1} parent=0 // pred_region
    %15 = vst [vmem:[%s2] sm:$0xff] 0.0
    %16 = vst [vmem:[%s2 + $0x8] sm:$0xff] 0.0
    %17 = vst [vmem:[%s2 + $0x10] sm:$0xff] 0.0
    %18 = vst [vmem:[%s2 + $0x18] sm:$0xff] 0.0
    %19 = vst [vmem:[%s2 + $0x20] sm:$0xff] 0.0
    %20 = vst [vmem:[%s2 + $0x28] sm:$0xff] 0.0
    %21 = vst [vmem:[%s2 + $0x30] sm:$0xff] 0.0
    %22 = vst [vmem:[%s2 + $0x38] sm:$0xff] 0.0
  $region13: #{deep_supervision_loss.1} parent=0 // pred_fallthru
    _
  %v23 = vld [vmem:[%s0] sm:$0xff]
  %v24 = vld [vmem:[%s0 + $0x8] sm:$0xff]
  %v25 = vld [vmem:[%s1] sm:$0xff]
  %v26 = vld [vmem:[%s1 + $0x8] sm:$0xff]
  %v27 = vand.u32 2147483647, %v23
  %v28 = vand.u32 2147483647, %v24
  %v29 = vsub.f32 0.0, %v27
  %v30 = vsub.f32 0.0, %v28
  %v31 = vmul.f32 %v29, 1.442695
  %v32 = vpow.pop %v31
  %v33 = vmul.f32 %v30, 1.442695
  %v34 = vpow.pop %v33
  %v35 = vmax.f32 %v23, 0.0
  %v36 = vmax.f32 %v24, 0.0
  %v37 = vmul.f32 %v23, %v25
  %v38 = vmul.f32 %v24, %v26
  %v39 = vsub.f32 %v35, %v37
  %v40 = vsub.f32 %v36, %v38
  %v41 = vadd.f32 %v32, 1.0
  %v42 = vlog2.pop %v41
  %v43 = vmul.f32 %v42, 0.6931472
  %v44 = vmul.f32 -0.5, %v32
  %v45 = vadd.f32 %v44, 1.0
  %v46 = vmul.f32 %v45, %v32
  %v47 = vand.u32 2147483647, %v32
  %vm48 = vcmp.lt.f32.partialorder %v47, 0.0004427343
  %v49 = vsel %vm48, %v46, %v43
  %v50 = vadd.f32 %v34, 1.0
  %v51 = vlog2.pop %v50
  %v52 = vmul.f32 %v51, 0.6931472
  %v53 = vmul.f32 -0.5, %v34
  %v54 = vadd.f32 %v53, 1.0
  %v55 = vmul.f32 %v54, %v34
  %v56 = vand.u32 2147483647, %v34
  %vm57 = vcmp.lt.f32.partialorder %v56, 0.0004427343
  %v58 = vsel %vm57, %v55, %v52
  %v59 = vadd.f32 %v39, %v49
  %v60 = vadd.f32 %v40, %v58
  %vm61 = vcmp.ge.f32.partialorder %v23, 0.0
  %vm62 = vcmp.ge.f32.partialorder %v24, 0.0
  %v63 = vsel %vm61, 1.0, %v32
  %v64 = vsel %vm62, 1.0, %v34
  %v65 = vadd.f32 %v32, 1.0
  %v66 = vadd.f32 %v34, 1.0
  %v67 = vrcp.pop %v65
  %v68 = vmul.f32 %v63, %v67
  %v69 = vrcp.pop %v66
  %v70 = vmul.f32 %v64, %v69
  %v71 = vmul.f32 %v68, %v25
  %v72 = vmul.f32 %v70, %v26
  %v73 = vrot.slane %v59, 4
  %v74 = vadd.f32 %v59, %v73
  %v75 = vrot.slane %v74, 2
  %v76 = vadd.f32 %v74, %v75
  %v77 = vrot.slane %v76, 1
  %v78 = vadd.f32 %v76, %v77
  %v79 = vrot.slane %v60, 4
  %v80 = vadd.f32 %v60, %v79
  %v81 = vrot.slane %v80, 2
  %v82 = vadd.f32 %v80, %v81
  %v83 = vrot.slane %v82, 1
  %v84 = vadd.f32 %v82, %v83
  %v85 = vrot.slane %v71, 4
  %v86 = vadd.f32 %v71, %v85
  %v87 = vrot.slane %v86, 2
  %v88 = vadd.f32 %v86, %v87
  %v89 = vrot.slane %v88, 1
  %v90 = vadd.f32 %v88, %v89
  %v91 = vrot.slane %v72, 4
  %v92 = vadd.f32 %v72, %v91
  %v93 = vrot.slane %v92, 2
  %v94 = vadd.f32 %v92, %v93
  %v95 = vrot.slane %v94, 1
  %v96 = vadd.f32 %v94, %v95
  %v97 = vrot.slane %v68, 4
  %v98 = vadd.f32 %v68, %v97
  %v99 = vrot.slane %v98, 2
  %v100 = vadd.f32 %v98, %v99
  %v101 = vrot.slane %v100, 1
  %v102 = vadd.f32 %v100, %v101
  %v103 = vrot.slane %v70, 4
  %v104 = vadd.f32 %v70, %v103
  %v105 = vrot.slane %v104, 2
  %v106 = vadd.f32 %v104, %v105
  %v107 = vrot.slane %v106, 1
  %v108 = vadd.f32 %v106, %v107
  %v109 = vrot.slane %v25, 4
  %v110 = vadd.f32 %v25, %v109
  %v111 = vrot.slane %v110, 2
  %v112 = vadd.f32 %v110, %v111
  %v113 = vrot.slane %v112, 1
  %v114 = vadd.f32 %v112, %v113
  %v115 = vrot.slane %v26, 4
  %v116 = vadd.f32 %v26, %v115
  %v117 = vrot.slane %v116, 2
  %v118 = vadd.f32 %v116, %v117
  %v119 = vrot.slane %v118, 1
  %v120 = vadd.f32 %v118, %v119
  %vm121 = vcmask 1040384
  %v122 = vsel %vm121, %v78, %v90
  %v123 = vsel %vm121, %v84, %v96
  %vm124 = vcmask 1041408
  %v125 = vsel %vm124, %v122, %v102
  %v126 = vsel %vm124, %v123, %v108
  %vm127 = vcmask 1042432
  %v128 = vsel %vm127, %v125, %v114
  %v129 = vsel %vm127, %v126, %v120
  %s130 = smul.u32 0, 8
  %s131 = sadd.s32 %s130, 8
  %v132 = vlaneseq
  %v133 = vshrl.u32 %v132, 7
  %v134 = vstv %s130
  %v135 = vadd.s32 %v134, %v133
  %p136 = scmp.ge.s32.totalorder %s130, 0
  %p137 = scmp.le.s32.totalorder %s131, 2
  %p138 = pnand %p136, %p137
  %p139 = pneg %p138
  %p140 = scmp.lt.s32.totalorder %s130, 2
  %p141 = scmp.gt.s32.totalorder %s131, 0
  %p142 = pnand %p140, %p141
  %p143 = pneg %p142
  %p144 = pneg %p139
  %p145 = pnand %p143, %p144
  %p146 = pneg %p145
  // Predicated region
  $region14: #{deep_supervision_loss.1} parent=0 // pred_check
    _
  $region15: #{deep_supervision_loss.1} parent=0 // pred_check_branch
    %148 = sbr.rel (%p138) target = $region17
  $region16: #{deep_supervision_loss.1} parent=0 // pred_region
    %v149 = vld [vmem:[%s2] sm:$0xf]
    %v150 = vld [vmem:[%s2 + $0x20] sm:$0xf]
    %v151 = vadd.f32 %v149, %v128
    %v152 = vadd.f32 %v150, %v129
    %153 = vst [vmem:[%s2] sm:$0xf] %v151
    %154 = vst [vmem:[%s2 + $0x20] sm:$0xf] %v152
  $region17: #{deep_supervision_loss.1} parent=0 // pred_fallthru
    _
  // Predicated region
  $region18: #{deep_supervision_loss.1} parent=0 // pred_check
    _
  $region19: #{deep_supervision_loss.1} parent=0 // pred_check_branch
    %156 = sbr.rel (%p145) target = $region21
  $region20: #{deep_supervision_loss.1} parent=0 // pred_region
    %vm157 = vcmp.ge.s32.totalorder %v135, 0
    %vm158 = vcmp.lt.s32.totalorder %v135, 2
    %vm159 = vmand %vm157, %vm158
    %v160 = vsel %vm159, 1, 0
    %v161 = vcvt.s32.f32 %v160
    %v162 = vmul.f32 %v59, %v161
    %v163 = vmul.f32 %v60, %v161
    %v164 = vrot.slane %v162, 4
    %v165 = vadd.f32 %v162, %v164
    %v166 = vrot.slane %v165, 2
    %v167 = vadd.f32 %v165, %v166
    %v168 = vrot.slane %v167, 1
    %v169 = vadd.f32 %v167, %v168
    %v170 = vrot.slane %v163, 4
    %v171 = vadd.f32 %v163, %v170
    %v172 = vrot.slane %v171, 2
    %v173 = vadd.f32 %v171, %v172
    %v174 = vrot.slane %v173, 1
    %v175 = vadd.f32 %v173, %v174
    %v176 = vmul.f32 %v71, %v161
    %v177 = vmul.f32 %v72, %v161
    %v178 = vrot.slane %v176, 4
    %v179 = vadd.f32 %v176, %v178
    %v180 = vrot.slane %v179, 2
    %v181 = vadd.f32 %v179, %v180
    %v182 = vrot.slane %v181, 1
    %v183 = vadd.f32 %v181, %v182
    %v184 = vrot.slane %v177, 4
    %v185 = vadd.f32 %v177, %v184
    %v186 = vrot.slane %v185, 2
    %v187 = vadd.f32 %v185, %v186
    %v188 = vrot.slane %v187, 1
    %v189 = vadd.f32 %v187, %v188
    %v190 = vmul.f32 %v68, %v161
    %v191 = vmul.f32 %v70, %v161
    %v192 = vrot.slane %v190, 4
    %v193 = vadd.f32 %v190, %v192
    %v194 = vrot.slane %v193, 2
    %v195 = vadd.f32 %v193, %v194
    %v196 = vrot.slane %v195, 1
    %v197 = vadd.f32 %v195, %v196
    %v198 = vrot.slane %v191, 4
    %v199 = vadd.f32 %v191, %v198
    %v200 = vrot.slane %v199, 2
    %v201 = vadd.f32 %v199, %v200
    %v202 = vrot.slane %v201, 1
    %v203 = vadd.f32 %v201, %v202
    %v204 = vmul.f32 %v25, %v161
    %v205 = vmul.f32 %v26, %v161
    %v206 = vrot.slane %v204, 4
    %v207 = vadd.f32 %v204, %v206
    %v208 = vrot.slane %v207, 2
    %v209 = vadd.f32 %v207, %v208
    %v210 = vrot.slane %v209, 1
    %v211 = vadd.f32 %v209, %v210
    %v212 = vrot.slane %v205, 4
    %v213 = vadd.f32 %v205, %v212
    %v214 = vrot.slane %v213, 2
    %v215 = vadd.f32 %v213, %v214
    %v216 = vrot.slane %v215, 1
    %v217 = vadd.f32 %v215, %v216
    %v218 = vsel %vm121, %v169, %v183
    %v219 = vsel %vm121, %v175, %v189
    %v220 = vsel %vm124, %v218, %v197
    %v221 = vsel %vm124, %v219, %v203
    %v222 = vsel %vm127, %v220, %v211
    %v223 = vsel %vm127, %v221, %v217
    %v224 = vld [vmem:[%s2] sm:$0xf]
    %v225 = vld [vmem:[%s2 + $0x20] sm:$0xf]
    %v226 = vadd.f32 %v224, %v222
    %v227 = vadd.f32 %v225, %v223
    %228 = vst [vmem:[%s2] sm:$0xf] %v226
    %229 = vst [vmem:[%s2 + $0x20] sm:$0xf] %v227
  $region21: #{deep_supervision_loss.1} parent=0 // pred_fallthru
    _
  %p230 = scmp.ge.s32.totalorder %s130, 2
  %p231 = scmp.le.s32.totalorder %s131, 3
  %p232 = pnand %p230, %p231
  %p233 = pneg %p232
  %p234 = scmp.lt.s32.totalorder %s130, 3
  %p235 = scmp.gt.s32.totalorder %s131, 2
  %p236 = pnand %p234, %p235
  %p237 = pneg %p236
  %p238 = pneg %p233
  %p239 = pnand %p237, %p238
  %p240 = pneg %p239
  // Predicated region
  $region22: #{deep_supervision_loss.1} parent=0 // pred_check
    _
  $region23: #{deep_supervision_loss.1} parent=0 // pred_check_branch
    %242 = sbr.rel (%p232) target = $region25
  $region24: #{deep_supervision_loss.1} parent=0 // pred_region
    %v243 = vld [vmem:[%s2 + $0x8] sm:$0xf]
    %v244 = vld [vmem:[%s2 + $0x28] sm:$0xf]
    %v245 = vadd.f32 %v243, %v128
    %v246 = vadd.f32 %v244, %v129
    %247 = vst [vmem:[%s2 + $0x8] sm:$0xf] %v245
    %248 = vst [vmem:[%s2 + $0x28] sm:$0xf] %v246
  $region25: #{deep_supervision_loss.1} parent=0 // pred_fallthru
    _
  // Predicated region
  $region26: #{deep_supervision_loss.1} parent=0 // pred_check
    _
  $region27: #{deep_supervision_loss.1} parent=0 // pred_check_branch
    %250 = sbr.rel (%p239) target = $region29
  $region28: #{deep_supervision_loss.1} parent=0 // pred_region
    %vm251 = vcmp.ge.s32.totalorder %v135, 2
    %vm252 = vcmp.lt.s32.totalorder %v135, 3
    %vm253 = vmand %vm251, %vm252
    %v254 = vsel %vm253, 1, 0
    %v255 = vcvt.s32.f32 %v254
    %v256 = vmul.f32 %v59, %v255
    %v257 = vmul.f32 %v60, %v255
    %v258 = vrot.slane %v256, 4
    %v259 = vadd.f32 %v256, %v258
    %v260 = vrot.slane %v259, 2
    %v261 = vadd.f32 %v259, %v260
    %v262 = vrot.slane %v261, 1
    %v263 = vadd.f32 %v261, %v262
    %v264 = vrot.slane %v257, 4
    %v265 = vadd.f32 %v257, %v264
    %v266 = vrot.slane %v265, 2
    %v267 = vadd.f32 %v265, %v266
    %v268 = vrot.slane %v267, 1
    %v269 = vadd.f32 %v267, %v268
    %v270 = vmul.f32 %v71, %v255
    %v271 = vmul.f32 %v72, %v255
    %v272 = vrot.slane %v270, 4
    %v273 = vadd.f32 %v270, %v272
    %v274 = vrot.slane %v273, 2
    %v275 = vadd.f32 %v273, %v274
    %v276 = vrot.slane %v275, 1
    %v277 = vadd.f32 %v275, %v276
    %v278 = vrot.slane %v271, 4
    %v279 = vadd.f32 %v271, %v278
    %v280 = vrot.slane %v279, 2
    %v281 = vadd.f32 %v279, %v280
    %v282 = vrot.slane %v281, 1
    %v283 = vadd.f32 %v281, %v282
    %v284 = vmul.f32 %v68, %v255
    %v285 = vmul.f32 %v70, %v255
    %v286 = vrot.slane %v284, 4
    %v287 = vadd.f32 %v284, %v286
    %v288 = vrot.slane %v287, 2
    %v289 = vadd.f32 %v287, %v288
    %v290 = vrot.slane %v289, 1
    %v291 = vadd.f32 %v289, %v290
    %v292 = vrot.slane %v285, 4
    %v293 = vadd.f32 %v285, %v292
    %v294 = vrot.slane %v293, 2
    %v295 = vadd.f32 %v293, %v294
    %v296 = vrot.slane %v295, 1
    %v297 = vadd.f32 %v295, %v296
    %v298 = vmul.f32 %v25, %v255
    %v299 = vmul.f32 %v26, %v255
    %v300 = vrot.slane %v298, 4
    %v301 = vadd.f32 %v298, %v300
    %v302 = vrot.slane %v301, 2
    %v303 = vadd.f32 %v301, %v302
    %v304 = vrot.slane %v303, 1
    %v305 = vadd.f32 %v303, %v304
    %v306 = vrot.slane %v299, 4
    %v307 = vadd.f32 %v299, %v306
    %v308 = vrot.slane %v307, 2
    %v309 = vadd.f32 %v307, %v308
    %v310 = vrot.slane %v309, 1
    %v311 = vadd.f32 %v309, %v310
    %v312 = vsel %vm121, %v263, %v277
    %v313 = vsel %vm121, %v269, %v283
    %v314 = vsel %vm124, %v312, %v291
    %v315 = vsel %vm124, %v313, %v297
    %v316 = vsel %vm127, %v314, %v305
    %v317 = vsel %vm127, %v315, %v311
    %v318 = vld [vmem:[%s2 + $0x8] sm:$0xf]
    %v319 = vld [vmem:[%s2 + $0x28] sm:$0xf]
    %v320 = vadd.f32 %v318, %v316
    %v321 = vadd.f32 %v319, %v317
    %322 = vst [vmem:[%s2 + $0x8] sm:$0xf] %v320
    %323 = vst [vmem:[%s2 + $0x28] sm:$0xf] %v321
  $region29: #{deep_supervision_loss.1} parent=0 // pred_fallthru
    _
  %p324 = scmp.ge.s32.totalorder %s130, 3
  %p325 = scmp.le.s32.totalorder %s131, 4
  %p326 = pnand %p324, %p325
  %p327 = pneg %p326
  %p328 = scmp.lt.s32.totalorder %s130, 4
  %p329 = scmp.gt.s32.totalorder %s131, 3
  %p330 = pnand %p328, %p329
  %p331 = pneg %p330
  %p332 = pneg %p327
  %p333 = pnand %p331, %p332
  %p334 = pneg %p333
  // Predicated region
  $region30: #{deep_supervision_loss.1} parent=0 // pred_check
    _
  $region31: #{deep_supervision_loss.1} parent=0 // pred_check_branch
    %336 = sbr.rel (%p326) target = $region33
  $region32: #{deep_supervision_loss.1} parent=0 // pred_region
    %v337 = vld [vmem:[%s2 + $0x10] sm:$0xf]
    %v338 = vld [vmem:[%s2 + $0x30] sm:$0xf]
    %v339 = vadd.f32 %v337, %v128
    %v340 = vadd.f32 %v338, %v129
    %341 = vst [vmem:[%s2 + $0x10] sm:$0xf] %v339
    %342 = vst [vmem:[%s2 + $0x30] sm:$0xf] %v340
  $region33: #{deep_supervision_loss.1} parent=0 // pred_fallthru
    _
  // Predicated region
  $region34: #{deep_supervision_loss.1} parent=0 // pred_check
    _
  $region35: #{deep_supervision_loss.1} parent=0 // pred_check_branch
    %344 = sbr.rel (%p333) target = $region37
  $region36: #{deep_supervision_loss.1} parent=0 // pred_region
    %vm345 = vcmp.ge.s32.totalorder %v135, 3
    %vm346 = vcmp.lt.s32.totalorder %v135, 4
    %vm347 = vmand %vm345, %vm346
    %v348 = vsel %vm347, 1, 0
    %v349 = vcvt.s32.f32 %v348
    %v350 = vmul.f32 %v59, %v349
    %v351 = vmul.f32 %v60, %v349
    %v352 = vrot.slane %v350, 4
    %v353 = vadd.f32 %v350, %v352
    %v354 = vrot.slane %v353, 2
    %v355 = vadd.f32 %v353, %v354
    %v356 = vrot.slane %v355, 1
    %v357 = vadd.f32 %v355, %v356
    %v358 = vrot.slane %v351, 4
    %v359 = vadd.f32 %v351, %v358
    %v360 = vrot.slane %v359, 2
    %v361 = vadd.f32 %v359, %v360
    %v362 = vrot.slane %v361, 1
    %v363 = vadd.f32 %v361, %v362
    %v364 = vmul.f32 %v71, %v349
    %v365 = vmul.f32 %v72, %v349
    %v366 = vrot.slane %v364, 4
    %v367 = vadd.f32 %v364, %v366
    %v368 = vrot.slane %v367, 2
    %v369 = vadd.f32 %v367, %v368
    %v370 = vrot.slane %v369, 1
    %v371 = vadd.f32 %v369, %v370
    %v372 = vrot.slane %v365, 4
    %v373 = vadd.f32 %v365, %v372
    %v374 = vrot.slane %v373, 2
    %v375 = vadd.f32 %v373, %v374
    %v376 = vrot.slane %v375, 1
    %v377 = vadd.f32 %v375, %v376
    %v378 = vmul.f32 %v68, %v349
    %v379 = vmul.f32 %v70, %v349
    %v380 = vrot.slane %v378, 4
    %v381 = vadd.f32 %v378, %v380
    %v382 = vrot.slane %v381, 2
    %v383 = vadd.f32 %v381, %v382
    %v384 = vrot.slane %v383, 1
    %v385 = vadd.f32 %v383, %v384
    %v386 = vrot.slane %v379, 4
    %v387 = vadd.f32 %v379, %v386
    %v388 = vrot.slane %v387, 2
    %v389 = vadd.f32 %v387, %v388
    %v390 = vrot.slane %v389, 1
    %v391 = vadd.f32 %v389, %v390
    %v392 = vmul.f32 %v25, %v349
    %v393 = vmul.f32 %v26, %v349
    %v394 = vrot.slane %v392, 4
    %v395 = vadd.f32 %v392, %v394
    %v396 = vrot.slane %v395, 2
    %v397 = vadd.f32 %v395, %v396
    %v398 = vrot.slane %v397, 1
    %v399 = vadd.f32 %v397, %v398
    %v400 = vrot.slane %v393, 4
    %v401 = vadd.f32 %v393, %v400
    %v402 = vrot.slane %v401, 2
    %v403 = vadd.f32 %v401, %v402
    %v404 = vrot.slane %v403, 1
    %v405 = vadd.f32 %v403, %v404
    %v406 = vsel %vm121, %v357, %v371
    %v407 = vsel %vm121, %v363, %v377
    %v408 = vsel %vm124, %v406, %v385
    %v409 = vsel %vm124, %v407, %v391
    %v410 = vsel %vm127, %v408, %v399
    %v411 = vsel %vm127, %v409, %v405
    %v412 = vld [vmem:[%s2 + $0x10] sm:$0xf]
    %v413 = vld [vmem:[%s2 + $0x30] sm:$0xf]
    %v414 = vadd.f32 %v412, %v410
    %v415 = vadd.f32 %v413, %v411
    %416 = vst [vmem:[%s2 + $0x10] sm:$0xf] %v414
    %417 = vst [vmem:[%s2 + $0x30] sm:$0xf] %v415
  $region37: #{deep_supervision_loss.1} parent=0 // pred_fallthru
    _
  %p418 = scmp.ge.s32.totalorder %s130, 4
  %p419 = scmp.le.s32.totalorder %s131, 5
  %p420 = pnand %p418, %p419
  %p421 = pneg %p420
  %p422 = scmp.lt.s32.totalorder %s130, 5
  %p423 = scmp.gt.s32.totalorder %s131, 4
  %p424 = pnand %p422, %p423
  %p425 = pneg %p424
  %p426 = pneg %p421
  %p427 = pnand %p425, %p426
  %p428 = pneg %p427
  // Predicated region
  $region38: #{deep_supervision_loss.1} parent=0 // pred_check
    _
  $region39: #{deep_supervision_loss.1} parent=0 // pred_check_branch
    %430 = sbr.rel (%p420) target = $region41
  $region40: #{deep_supervision_loss.1} parent=0 // pred_region
    %v431 = vld [vmem:[%s2 + $0x18] sm:$0xf]
    %v432 = vld [vmem:[%s2 + $0x38] sm:$0xf]
    %v433 = vadd.f32 %v431, %v128
    %v434 = vadd.f32 %v432, %v129
    %435 = vst [vmem:[%s2 + $0x18] sm:$0xf] %v433
    %436 = vst [vmem:[%s2 + $0x38] sm:$0xf] %v434
  $region41: #{deep_supervision_loss.1} parent=0 // pred_fallthru
    _
  // Predicated region
  $region42: #{deep_supervision_loss.1} parent=0 // pred_check
    _
  $region43: #{deep_supervision_loss.1} parent=0 // pred_check_branch
    %438 = sbr.rel (%p427) target = $region45
  $region44: #{deep_supervision_loss.1} parent=0 // pred_region
    %vm439 = vcmp.ge.s32.totalorder %v135, 4
    %vm440 = vcmp.lt.s32.totalorder %v135, 5
    %vm441 = vmand %vm439, %vm440
    %v442 = vsel %vm441, 1, 0
    %v443 = vcvt.s32.f32 %v442
    %v444 = vmul.f32 %v59, %v443
    %v445 = vmul.f32 %v60, %v443
    %v446 = vrot.slane %v444, 4
    %v447 = vadd.f32 %v444, %v446
    %v448 = vrot.slane %v447, 2
    %v449 = vadd.f32 %v447, %v448
    %v450 = vrot.slane %v449, 1
    %v451 = vadd.f32 %v449, %v450
    %v452 = vrot.slane %v445, 4
    %v453 = vadd.f32 %v445, %v452
    %v454 = vrot.slane %v453, 2
    %v455 = vadd.f32 %v453, %v454
    %v456 = vrot.slane %v455, 1
    %v457 = vadd.f32 %v455, %v456
    %v458 = vmul.f32 %v71, %v443
    %v459 = vmul.f32 %v72, %v443
    %v460 = vrot.slane %v458, 4
    %v461 = vadd.f32 %v458, %v460
    %v462 = vrot.slane %v461, 2
    %v463 = vadd.f32 %v461, %v462
    %v464 = vrot.slane %v463, 1
    %v465 = vadd.f32 %v463, %v464
    %v466 = vrot.slane %v459, 4
    %v467 = vadd.f32 %v459, %v466
    %v468 = vrot.slane %v467, 2
    %v469 = vadd.f32 %v467, %v468
    %v470 = vrot.slane %v469, 1
    %v471 = vadd.f32 %v469, %v470
    %v472 = vmul.f32 %v68, %v443
    %v473 = vmul.f32 %v70, %v443
    %v474 = vrot.slane %v472, 4
    %v475 = vadd.f32 %v472, %v474
    %v476 = vrot.slane %v475, 2
    %v477 = vadd.f32 %v475, %v476
    %v478 = vrot.slane %v477, 1
    %v479 = vadd.f32 %v477, %v478
    %v480 = vrot.slane %v473, 4
    %v481 = vadd.f32 %v473, %v480
    %v482 = vrot.slane %v481, 2
    %v483 = vadd.f32 %v481, %v482
    %v484 = vrot.slane %v483, 1
    %v485 = vadd.f32 %v483, %v484
    %v486 = vmul.f32 %v25, %v443
    %v487 = vmul.f32 %v26, %v443
    %v488 = vrot.slane %v486, 4
    %v489 = vadd.f32 %v486, %v488
    %v490 = vrot.slane %v489, 2
    %v491 = vadd.f32 %v489, %v490
    %v492 = vrot.slane %v491, 1
    %v493 = vadd.f32 %v491, %v492
    %v494 = vrot.slane %v487, 4
    %v495 = vadd.f32 %v487, %v494
    %v496 = vrot.slane %v495, 2
    %v497 = vadd.f32 %v495, %v496
    %v498 = vrot.slane %v497, 1
    %v499 = vadd.f32 %v497, %v498
    %v500 = vsel %vm121, %v451, %v465
    %v501 = vsel %vm121, %v457, %v471
    %v502 = vsel %vm124, %v500, %v479
    %v503 = vsel %vm124, %v501, %v485
    %v504 = vsel %vm127, %v502, %v493
    %v505 = vsel %vm127, %v503, %v499
    %v506 = vld [vmem:[%s2 + $0x18] sm:$0xf]
    %v507 = vld [vmem:[%s2 + $0x38] sm:$0xf]
    %v508 = vadd.f32 %v506, %v504
    %v509 = vadd.f32 %v507, %v505
    %510 = vst [vmem:[%s2 + $0x18] sm:$0xf] %v508
    %511 = vst [vmem:[%s2 + $0x38] sm:$0xf] %v509
  $region45: #{deep_supervision_loss.1} parent=0 // pred_fallthru
    _
  // Predicated region
  $region46: #{deep_supervision_loss.1} parent=0 // pred_check
    _
  $region47: #{deep_supervision_loss.1} parent=0 // pred_check_branch
    %513 = sbr.rel (0) target = $region49
  $region48: #{deep_supervision_loss.1} parent=0 // pred_region
    _
  $region49: #{deep_supervision_loss.1} parent=0 // pred_fallthru
    _
  // Predicated region
  $region50: #{deep_supervision_loss.1} parent=0 // pred_check
    _
  $region51: #{deep_supervision_loss.1} parent=0 // pred_check_branch
    %515 = sbr.rel (0) target = $region53
  $region52: #{deep_supervision_loss.1} parent=0 // pred_region
    _
  $region53: #{deep_supervision_loss.1} parent=0 // pred_fallthru
    _

</llo_original>
